<compile_context>
chip_gen: v5e
topology: v5e:2x2
jax: 0.10.0
libtpu: 0.0.40
codegen_flags: <defaults>
</compile_context>

<pallas_src>
import functools

import jax
import jax.numpy as jnp
from jax import lax
from jax.experimental import pallas as pl
from jax.experimental.pallas import tpu as pltpu


def mlp_kernel(x_ref, w1_ref, b1_ref, w2_ref, b2_ref, w3_ref, b3_ref,
               w4_ref, b4_ref, out_ref, *, chunk, n_chunks, use_bf16_mxu):
    """One batch tile, batch on the lane axis, processed in lane chunks.

    x_ref  : [IN,  TB]
    w1_ref : [H,   IN]   b1_ref : [H, 1]
    w2_ref : [H,   H]    b2_ref : [H, 1]
    w3_ref : [H,   H]    b3_ref : [H, 1]
    w4_ref : [H,   OUT]  b4_ref : [OUT, 1]   (fc4 weight pre-transposed)
    out_ref: [OUT, TB]
    """
    in_size = x_ref.shape[0]
    dot_dtype = jnp.bfloat16 if use_bf16_mxu else jnp.float32

    # Weights/biases are tiny ([32,32] and smaller): load once per tile and
    # keep them resident across all lane chunks.
    w1 = w1_ref[...]
    b1 = b1_ref[...]
    w2 = w2_ref[...].astype(dot_dtype)
    b2 = b2_ref[...]
    w3 = w3_ref[...].astype(dot_dtype)
    b3 = b3_ref[...]
    w4 = w4_ref[...]
    b4 = b4_ref[...]

    def chunk_body(c, carry):
        start = pl.multiple_of(c * chunk, chunk)        # chunk is a mult of 128
        xc = x_ref[:, pl.ds(start, chunk)]              # [IN, CH]

        # fc1: contraction length K = in_size = 2 is tiny -> VPU broadcast
        # multiply-adds instead of MXU fill/drain latency.
        h = b1 + w1[:, 0:1] * xc[0:1, :]
        for k in range(1, in_size):                     # static, tiny unroll
            h = h + w1[:, k:k + 1] * xc[k:k + 1, :]
        h = jnp.maximum(h, 0.0)
        # dropout(p=0.1): identity in eval mode.

        # fc2 / fc3: [H,H] @ [H,CH] on the MXU, bf16 operands, f32 accumulate.
        h = jnp.dot(w2, h.astype(dot_dtype),
                    preferred_element_type=jnp.float32) + b2
        h = jnp.maximum(h, 0.0)
        h = jnp.dot(w3, h.astype(dot_dtype),
                    preferred_element_type=jnp.float32) + b3
        h = jnp.maximum(h, 0.0)

        # fc4: output width 1 -> broadcast-multiply + cross-sublane reduce
        # (XLU), no MXU pass with N=1.
        if w4.shape[1] == 1:
            y = jnp.sum(w4 * h, axis=0, keepdims=True) + b4
        else:
            y = lax.dot_general(w4, h, (((0,), (0,)), ((), ())),
                                preferred_element_type=jnp.float32) + b4

        out_ref[:, pl.ds(start, chunk)] = y.astype(out_ref.dtype)
        return carry

    lax.fori_loop(0, n_chunks, chunk_body, 0, unroll=True)


def sequence_predictor_forward(x, params, *, max_tile_batch=8192,
                               use_bf16_mxu=True, feature_major=False):
    """Forward pass of SequencePredictor.

    x: [B, input_size] float32 (PyTorch layout), or [input_size, B] if
       feature_major=True (avoids the wrapper-side transpose entirely).
    params: PyTorch layout (W: [out_features, in_features], b: [out_features]).
    """
    if feature_major:
        in_size, B = x.shape
        xT = x
    else:
        B, in_size = x.shape
        xT = x.T                     # single cheap transpose; no zero-pad copy

    w1, b1 = params["w1"], params["b1"]
    w2, b2 = params["w2"], params["b2"]
    w3, b3 = params["w3"], params["b3"]
    w4, b4 = params["w4"], params["b4"]
    hidden = w1.shape[0]
    out_size = w4.shape[0]

    def round_up(a, m):
        return (a + m - 1) // m * m

    def cdiv(a, m):
        return (a + m - 1) // m

    # --- Tile sizing -------------------------------------------------------
    # Balanced tiles (minimal padding waste), >=2 (even) grid steps whenever
    # there are >=256 lanes of real work so both v7x TensorCores are used.
    B128 = round_up(max(B, 1), 128)
    n_tiles = cdiv(B128, max_tile_batch)
    if B128 >= 256:
        n_tiles = max(n_tiles, 2)
    if n_tiles > 1 and (n_tiles % 2):
        n_tiles += 1
    tile_batch = round_up(cdiv(B128, n_tiles), 128)
    # In-kernel lane chunk: 256 lanes keeps the [32, chunk] f32 intermediates
    # in ~8 vregs; fall back to 128 when the tile is an odd multiple of 128.
    chunk = 256 if tile_batch % 256 == 0 else 128
    n_chunks = tile_batch // chunk
    grid = (cdiv(B, tile_batch),)

    # Layout plumbing stays in the wrapper, not the kernel.
    b1c = b1.reshape(hidden, 1)
    b2c = b2.reshape(hidden, 1)
    b3c = b3.reshape(hidden, 1)
    w4t = w4.T                                   # [H, OUT]
    b4c = b4.reshape(out_size, 1)

    kernel = functools.partial(mlp_kernel, chunk=chunk, n_chunks=n_chunks,
                               use_bf16_mxu=use_bf16_mxu)

    batch_map = lambda i: (0, i)
    const_map = lambda i: (0, 0)
    full = lambda arr: pl.BlockSpec(arr.shape, const_map)

    out = pl.pallas_call(
        kernel,
        out_shape=jax.ShapeDtypeStruct((out_size, B), jnp.float32),
        grid=grid,
        in_specs=[
            pl.BlockSpec((in_size, tile_batch), batch_map),   # x tile
            full(w1), full(b1c),
            full(w2), full(b2c),
            full(w3), full(b3c),
            full(w4t), full(b4c),
        ],
        out_specs=pl.BlockSpec((out_size, tile_batch), batch_map),
        compiler_params=pltpu.CompilerParams(
            dimension_semantics=("parallel",)),
    )(xT, w1, b1c, w2, b2c, w3, b3c, w4t, b4c)

    return out.T                                  # [B, out_size]


def init_params(key, input_size=2, hidden_size=32, output_size=1):
    """Deterministic init mimicking nn.Linear's uniform(-1/sqrt(fan_in), +)."""
    def linear(k, fan_in, fan_out):
        kw, kb = jax.random.split(k)
        bound = 1.0 / jnp.sqrt(jnp.float32(fan_in))
        w = jax.random.uniform(kw, (fan_out, fan_in), jnp.float32, -bound, bound)
        b = jax.random.uniform(kb, (fan_out,), jnp.float32, -bound, bound)
        return w, b

    k1, k2, k3, k4 = jax.random.split(key, 4)
    w1, b1 = linear(k1, input_size, hidden_size)
    w2, b2 = linear(k2, hidden_size, hidden_size)
    w3, b3 = linear(k3, hidden_size, hidden_size)
    w4, b4 = linear(k4, hidden_size, output_size)
    return dict(w1=w1, b1=b1, w2=w2, b2=b2, w3=w3, b3=b3, w4=w4, b4=b4)


def reference_forward(x, p):
    h = jnp.maximum(x @ p["w1"].T + p["b1"], 0.0)
    h = jnp.maximum(h @ p["w2"].T + p["b2"], 0.0)
    h = jnp.maximum(h @ p["w3"].T + p["b3"], 0.0)
    return h @ p["w4"].T + p["b4"]


if __name__ == "__main__":
    key = jax.random.PRNGKey(0)
    kp, kx, kx2 = jax.random.split(key, 3)

    input_size, hidden_size, output_size = 2, 32, 1
    batch = 16  # sequence of 16 (t, value) pairs flattened as batch rows

    params = init_params(kp, input_size, hidden_size, output_size)
    x = jax.random.normal(kx, (batch, input_size), jnp.float32)

    y = sequence_predictor_forward(x, params)
    y = jax.block_until_ready(y)
    y_ref = reference_forward(x, params)
    assert y.shape == (batch, output_size)
    # bf16 MXU operands (f32 accumulation) -> looser tolerance than pure f32.
    assert jnp.allclose(y, y_ref, atol=2e-2, rtol=2e-2), "mismatch vs reference"

    # Second check: exercises the multi-tile grid (2 steps), in-kernel lane
    # chunking and the ragged (non-divisible) last block.
    x2 = jax.random.normal(kx2, (300, input_size), jnp.float32)
    y2 = jax.block_until_ready(sequence_predictor_forward(x2, params))
    y2_ref = reference_forward(x2, params)
    assert y2.shape == (300, output_size)
    assert jnp.allclose(y2, y2_ref, atol=2e-2, rtol=2e-2), "mismatch (B=300)"

    print("KERNEL_OK")
</pallas_src>

<mosaic_0001>
module attributes {stable_mosaic.version = 11 : i64} {
  func.func @mlp_kernel(%arg0: i32, %arg1: memref<2x128xf32, #tpu.memory_space<vmem>>, %arg2: memref<32x2xf32, #tpu.memory_space<vmem>>, %arg3: memref<32x1xf32, #tpu.memory_space<vmem>>, %arg4: memref<32x32xf32, #tpu.memory_space<vmem>>, %arg5: memref<32x1xf32, #tpu.memory_space<vmem>>, %arg6: memref<32x32xf32, #tpu.memory_space<vmem>>, %arg7: memref<32x1xf32, #tpu.memory_space<vmem>>, %arg8: memref<32x1xf32, #tpu.memory_space<vmem>>, %arg9: memref<1x1xf32, #tpu.memory_space<vmem>>, %arg10: memref<1x128xf32, #tpu.memory_space<vmem>>) attributes {dimension_semantics = [#tpu.dimension_semantics<parallel>], iteration_bounds = array<i64: 1>, scalar_prefetch = 0 : i64, scratch_operands = 0 : i64, tpu.core_type = #tpu.core_type<tc>, window_params = [{transform_indices = @transform_0, window_bounds = array<i64: 2, 128>}, {pipeline_mode = #tpu.pipeline_mode<synchronous>, transform_indices = @transform_1, window_bounds = array<i64: 32, 2>}, {pipeline_mode = #tpu.pipeline_mode<synchronous>, transform_indices = @transform_2, window_bounds = array<i64: 32, 1>}, {pipeline_mode = #tpu.pipeline_mode<synchronous>, transform_indices = @transform_3, window_bounds = array<i64: 32, 32>}, {pipeline_mode = #tpu.pipeline_mode<synchronous>, transform_indices = @transform_4, window_bounds = array<i64: 32, 1>}, {pipeline_mode = #tpu.pipeline_mode<synchronous>, transform_indices = @transform_5, window_bounds = array<i64: 32, 32>}, {pipeline_mode = #tpu.pipeline_mode<synchronous>, transform_indices = @transform_6, window_bounds = array<i64: 32, 1>}, {pipeline_mode = #tpu.pipeline_mode<synchronous>, transform_indices = @transform_7, window_bounds = array<i64: 32, 1>}, {pipeline_mode = #tpu.pipeline_mode<synchronous>, transform_indices = @transform_8, window_bounds = array<i64: 1, 1>}, {transform_indices = @transform_9, window_bounds = array<i64: 1, 128>}]} {
    %c0 = arith.constant 0 : index
    %c0_0 = arith.constant 0 : index
    %0 = vector.load %arg2[%c0, %c0_0] : memref<32x2xf32, #tpu.memory_space<vmem>>, vector<32x2xf32>
    %c0_1 = arith.constant 0 : index
    %c0_2 = arith.constant 0 : index
    %1 = vector.load %arg3[%c0_1, %c0_2] : memref<32x1xf32, #tpu.memory_space<vmem>>, vector<32x1xf32>
    %c0_3 = arith.constant 0 : index
    %c0_4 = arith.constant 0 : index
    %2 = vector.load %arg4[%c0_3, %c0_4] : memref<32x32xf32, #tpu.memory_space<vmem>>, vector<32x32xf32>
    %3 = arith.truncf %2 : vector<32x32xf32> to vector<32x32xbf16>
    %c0_5 = arith.constant 0 : index
    %c0_6 = arith.constant 0 : index
    %4 = vector.load %arg5[%c0_5, %c0_6] : memref<32x1xf32, #tpu.memory_space<vmem>>, vector<32x1xf32>
    %c0_7 = arith.constant 0 : index
    %c0_8 = arith.constant 0 : index
    %5 = vector.load %arg6[%c0_7, %c0_8] : memref<32x32xf32, #tpu.memory_space<vmem>>, vector<32x32xf32>
    %6 = arith.truncf %5 : vector<32x32xf32> to vector<32x32xbf16>
    %c0_9 = arith.constant 0 : index
    %c0_10 = arith.constant 0 : index
    %7 = vector.load %arg7[%c0_9, %c0_10] : memref<32x1xf32, #tpu.memory_space<vmem>>, vector<32x1xf32>
    %c0_11 = arith.constant 0 : index
    %c0_12 = arith.constant 0 : index
    %8 = vector.load %arg8[%c0_11, %c0_12] : memref<32x1xf32, #tpu.memory_space<vmem>>, vector<32x1xf32>
    %c0_13 = arith.constant 0 : index
    %c0_14 = arith.constant 0 : index
    %9 = vector.load %arg9[%c0_13, %c0_14] : memref<1x1xf32, #tpu.memory_space<vmem>>, vector<1x1xf32>
    %c0_i32 = arith.constant 0 : i32
    %c128_i32 = arith.constant 128 : i32
    %10 = arith.muli %c0_i32, %c128_i32 : i32
    %11 = tpu.assume_multiple %10, 128 : i32
    %c0_15 = arith.constant 0 : index
    %12 = arith.index_cast %11 : i32 to index
    %13 = vector.load %arg1[%c0_15, %12] : memref<2x128xf32, #tpu.memory_space<vmem>>, vector<2x128xf32>
    %14 = vector.extract_strided_slice %0 {offsets = [0, 0], sizes = [32, 1], strides = [1, 1]} : vector<32x2xf32> to vector<32x1xf32>
    %15 = vector.extract_strided_slice %13 {offsets = [0, 0], sizes = [1, 128], strides = [1, 1]} : vector<2x128xf32> to vector<1x128xf32>
    %16 = vector.broadcast %14 : vector<32x1xf32> to vector<32x128xf32>
    %17 = vector.broadcast %15 : vector<1x128xf32> to vector<32x128xf32>
    %18 = arith.mulf %16, %17 : vector<32x128xf32>
    %19 = vector.broadcast %1 : vector<32x1xf32> to vector<32x128xf32>
    %20 = arith.addf %19, %18 : vector<32x128xf32>
    %21 = vector.extract_strided_slice %0 {offsets = [0, 1], sizes = [32, 1], strides = [1, 1]} : vector<32x2xf32> to vector<32x1xf32>
    %22 = vector.extract_strided_slice %13 {offsets = [1, 0], sizes = [1, 128], strides = [1, 1]} : vector<2x128xf32> to vector<1x128xf32>
    %23 = vector.broadcast %21 : vector<32x1xf32> to vector<32x128xf32>
    %24 = vector.broadcast %22 : vector<1x128xf32> to vector<32x128xf32>
    %25 = arith.mulf %23, %24 : vector<32x128xf32>
    %26 = arith.addf %20, %25 : vector<32x128xf32>
    %cst = arith.constant 0.000000e+00 : f32
    %27 = vector.broadcast %cst : f32 to vector<32x128xf32>
    %28 = arith.maximumf %26, %27 : vector<32x128xf32>
    %29 = arith.truncf %28 : vector<32x128xf32> to vector<32x128xbf16>
    %cst_16 = arith.constant dense<0.000000e+00> : vector<32x128xf32>
    %30 = tpu.matmul %3, %29, %cst_16 {dimension_numbers = #tpu.dot_dimension_numbers<[1], [0], [0], [1], [0, 0, 1, 1], [], []>} : vector<32x32xbf16>, vector<32x128xbf16>, vector<32x128xf32> -> vector<32x128xf32>
    %31 = vector.broadcast %4 : vector<32x1xf32> to vector<32x128xf32>
    %32 = arith.addf %30, %31 : vector<32x128xf32>
    %cst_17 = arith.constant 0.000000e+00 : f32
    %33 = vector.broadcast %cst_17 : f32 to vector<32x128xf32>
    %34 = arith.maximumf %32, %33 : vector<32x128xf32>
    %35 = arith.truncf %34 : vector<32x128xf32> to vector<32x128xbf16>
    %cst_18 = arith.constant dense<0.000000e+00> : vector<32x128xf32>
    %36 = tpu.matmul %6, %35, %cst_18 {dimension_numbers = #tpu.dot_dimension_numbers<[1], [0], [0], [1], [0, 0, 1, 1], [], []>} : vector<32x32xbf16>, vector<32x128xbf16>, vector<32x128xf32> -> vector<32x128xf32>
    %37 = vector.broadcast %7 : vector<32x1xf32> to vector<32x128xf32>
    %38 = arith.addf %36, %37 : vector<32x128xf32>
    %cst_19 = arith.constant 0.000000e+00 : f32
    %39 = vector.broadcast %cst_19 : f32 to vector<32x128xf32>
    %40 = arith.maximumf %38, %39 : vector<32x128xf32>
    %41 = vector.broadcast %8 : vector<32x1xf32> to vector<32x128xf32>
    %42 = arith.mulf %41, %40 : vector<32x128xf32>
    %cst_20 = arith.constant dense<0.000000e+00> : vector<128xf32>
    %43 = vector.multi_reduction <add>, %42, %cst_20 [0] : vector<32x128xf32> to vector<128xf32>
    %44 = vector.shape_cast %43 : vector<128xf32> to vector<1x128xf32>
    %45 = vector.broadcast %9 : vector<1x1xf32> to vector<1x128xf32>
    %46 = arith.addf %44, %45 : vector<1x128xf32>
    %c0_21 = arith.constant 0 : index
    %47 = arith.index_cast %11 : i32 to index
    %48 = vector.load %arg10[%c0_21, %47] : memref<1x128xf32, #tpu.memory_space<vmem>>, vector<1x128xf32>
    tpu.vector_store %arg10[%c0_21, %47], %46 {strides = array<i32>} : memref<1x128xf32, #tpu.memory_space<vmem>>, vector<1x128xf32>,
    %c1_i32 = arith.constant 1 : i32
    return
  }
  func.func @transform_0(%arg0: i32) -> (i32, i32) {
    %c0_i32 = arith.constant 0 : i32
    %c0_i32_0 = arith.constant 0 : i32
    return %c0_i32, %arg0 : i32, i32
  }
  func.func @transform_1(%arg0: i32) -> (i32, i32) {
    %c0_i32 = arith.constant 0 : i32
    %c0_i32_0 = arith.constant 0 : i32
    %c0_i32_1 = arith.constant 0 : i32
    return %c0_i32, %c0_i32_0 : i32, i32
  }
  func.func @transform_2(%arg0: i32) -> (i32, i32) {
    %c0_i32 = arith.constant 0 : i32
    %c0_i32_0 = arith.constant 0 : i32
    %c0_i32_1 = arith.constant 0 : i32
    return %c0_i32, %c0_i32_0 : i32, i32
  }
  func.func @transform_3(%arg0: i32) -> (i32, i32) {
    %c0_i32 = arith.constant 0 : i32
    %c0_i32_0 = arith.constant 0 : i32
    %c0_i32_1 = arith.constant 0 : i32
    return %c0_i32, %c0_i32_0 : i32, i32
  }
  func.func @transform_4(%arg0: i32) -> (i32, i32) {
    %c0_i32 = arith.constant 0 : i32
    %c0_i32_0 = arith.constant 0 : i32
    %c0_i32_1 = arith.constant 0 : i32
    return %c0_i32, %c0_i32_0 : i32, i32
  }
  func.func @transform_5(%arg0: i32) -> (i32, i32) {
    %c0_i32 = arith.constant 0 : i32
    %c0_i32_0 = arith.constant 0 : i32
    %c0_i32_1 = arith.constant 0 : i32
    return %c0_i32, %c0_i32_0 : i32, i32
  }
  func.func @transform_6(%arg0: i32) -> (i32, i32) {
    %c0_i32 = arith.constant 0 : i32
    %c0_i32_0 = arith.constant 0 : i32
    %c0_i32_1 = arith.constant 0 : i32
    return %c0_i32, %c0_i32_0 : i32, i32
  }
  func.func @transform_7(%arg0: i32) -> (i32, i32) {
    %c0_i32 = arith.constant 0 : i32
    %c0_i32_0 = arith.constant 0 : i32
    %c0_i32_1 = arith.constant 0 : i32
    return %c0_i32, %c0_i32_0 : i32, i32
  }
  func.func @transform_8(%arg0: i32) -> (i32, i32) {
    %c0_i32 = arith.constant 0 : i32
    %c0_i32_0 = arith.constant 0 : i32
    %c0_i32_1 = arith.constant 0 : i32
    return %c0_i32, %c0_i32_0 : i32, i32
  }
  func.func @transform_9(%arg0: i32) -> (i32, i32) {
    %c0_i32 = arith.constant 0 : i32
    %c0_i32_0 = arith.constant 0 : i32
    return %c0_i32, %arg0 : i32, i32
  }
}

</mosaic_0001>

<llo_original>
// kernel: tpu_custom_call.1
$region0: #{tpu_custom_call.1}
  #allocation0 [shape = 'u32[]', space=smem, size = 0x4, offset = 0x4, fixed_abs, tag = 'smem constant byte address 0x4 - core index']
  #allocation1 [shape = 'u32[72,128]{1,0:T(1,128)}', space=vmem, size = 0x9000, scoped, tag = 'internal scratch']
  #allocation2 [shape = 'f32[1,1]{1,0:T(1,128)S(1)}', space=vmem, size = 0x200, scoped, tag = 'scoped memory for tpu_custom_call.1']
  %s0 = inlined_call_operand.vmem [shape: f32[2,16], index: 0, kind: input, shape index: {}]
  %s1 = inlined_call_operand.vmem [shape: f32[32,2], index: 1, kind: input, shape index: {}]
  %s2 = inlined_call_operand.vmem [shape: f32[32,1], index: 2, kind: input, shape index: {}]
  %s3 = inlined_call_operand.vmem [shape: f32[32,32], index: 3, kind: input, shape index: {}]
  %s4 = inlined_call_operand.vmem [shape: f32[32,1], index: 4, kind: input, shape index: {}]
  %s5 = inlined_call_operand.vmem [shape: f32[32,32], index: 5, kind: input, shape index: {}]
  %s6 = inlined_call_operand.vmem [shape: f32[32,1], index: 6, kind: input, shape index: {}]
  %s7 = inlined_call_operand.vmem [shape: f32[32,1], index: 7, kind: input, shape index: {}]
  %s8 = inlined_call_operand.<no memory space> [shape: f32[1,1], index: 8, kind: input, shape index: {}]
  %s9 = inlined_call_operand.hbm [shape: f32[1,16], index: 9, kind: output, shape index: {}]
  %s10 = sld [smem:[#allocation0]]
  $region46: #{tpu_custom_call.1} parent=0
    _
  %s12 = ssub.s32 1, %s10
  %s13 = scalar_select 0, %s12, %s10
  %v14 = vstv %s8
  %15 = vst [vmem:[#allocation2] sm:$0x1] %v14
  $region1: #{tpu_custom_call.1} parent=0
    #allocation3 [shape = 'u8[512]{0}', space=vmem, size = 0x400, scoped, tag = 'output window, operand 0, single buffered']
    #allocation4 [shape = 's32[1]{0}', space=sflag, size = 0x4, scoped, tag = 'scoped memory for tpu_custom_call.1']
    %16 = vsyncpa [#allocation4], 0
    // Predicated region
    $region2: #{tpu_custom_call.1} parent=1 // pred_check
      _
    $region3: #{tpu_custom_call.1} parent=1 // pred_check_branch
      %18 = sbr.rel (0) target = $region5
    $region4: #{tpu_custom_call.1} parent=1 // pred_region
      _
    $region5: #{tpu_custom_call.1} parent=1 // pred_fallthru
      _
    // Predicated region
    $region6: #{tpu_custom_call.1} parent=1 // pred_check
      _
    $region7: #{tpu_custom_call.1} parent=1 // pred_check_branch
      %20 = sbr.rel (0) target = $region9
    $region8: #{tpu_custom_call.1} parent=1 // pred_region
      _
    $region9: #{tpu_custom_call.1} parent=1 // pred_fallthru
      _
    // Predicated region
    $region10: #{tpu_custom_call.1} parent=1 // pred_check
      _
    $region11: #{tpu_custom_call.1} parent=1 // pred_check_branch
      %22 = sbr.rel (0) target = $region13
    $region12: #{tpu_custom_call.1} parent=1 // pred_region
      _
    $region13: #{tpu_custom_call.1} parent=1 // pred_fallthru
      _
    // Predicated region
    $region14: #{tpu_custom_call.1} parent=1 // pred_check
      _
    $region15: #{tpu_custom_call.1} parent=1 // pred_check_branch
      %24 = sbr.rel (0) target = $region17
    $region16: #{tpu_custom_call.1} parent=1 // pred_region
      _
    $region17: #{tpu_custom_call.1} parent=1 // pred_fallthru
      _
    // Predicated region
    $region18: #{tpu_custom_call.1} parent=1 // pred_check
      _
    $region19: #{tpu_custom_call.1} parent=1 // pred_check_branch
      %26 = sbr.rel (0) target = $region21
    $region20: #{tpu_custom_call.1} parent=1 // pred_region
      _
    $region21: #{tpu_custom_call.1} parent=1 // pred_fallthru
      _
    // Predicated region
    $region22: #{tpu_custom_call.1} parent=1 // pred_check
      _
    $region23: #{tpu_custom_call.1} parent=1 // pred_check_branch
      %28 = sbr.rel (0) target = $region25
    $region24: #{tpu_custom_call.1} parent=1 // pred_region
      _
    $region25: #{tpu_custom_call.1} parent=1 // pred_fallthru
      _
    // Predicated region
    $region26: #{tpu_custom_call.1} parent=1 // pred_check
      _
    $region27: #{tpu_custom_call.1} parent=1 // pred_check_branch
      %30 = sbr.rel (0) target = $region29
    $region28: #{tpu_custom_call.1} parent=1 // pred_region
      _
    $region29: #{tpu_custom_call.1} parent=1 // pred_fallthru
      _
    // Predicated region
    $region30: #{tpu_custom_call.1} parent=1 // pred_check
      _
    $region31: #{tpu_custom_call.1} parent=1 // pred_check_branch
      %32 = sbr.rel (0) target = $region33
    $region32: #{tpu_custom_call.1} parent=1 // pred_region
      _
    $region33: #{tpu_custom_call.1} parent=1 // pred_fallthru
      _
    // Predicated region
    $region34: #{tpu_custom_call.1} parent=1 // pred_check
      _
    $region35: #{tpu_custom_call.1} parent=1 // pred_check_branch
      %34 = sbr.rel (0) target = $region37
    $region36: #{tpu_custom_call.1} parent=1 // pred_region
      _
    $region37: #{tpu_custom_call.1} parent=1 // pred_fallthru
      _
    %v36 = vld [vmem:[%s1] sm:$0xff]
    %v37 = vld [vmem:[%s1 + $0x8] sm:$0xff]
    %v38 = vld [vmem:[%s1 + $0x10] sm:$0xff]
    %v39 = vld [vmem:[%s1 + $0x18] sm:$0xff]
    %v40 = vld [vmem:[%s2] sm:$0xff]
    %v41 = vld [vmem:[%s2 + $0x8] sm:$0xff]
    %v42 = vld [vmem:[%s2 + $0x10] sm:$0xff]
    %v43 = vld [vmem:[%s2 + $0x18] sm:$0xff]
    %v44 = vld [vmem:[%s3] sm:$0xff]
    %v45 = vld [vmem:[%s3 + $0x8] sm:$0xff]
    %v46 = vld [vmem:[%s3 + $0x10] sm:$0xff]
    %v47 = vld [vmem:[%s3 + $0x18] sm:$0xff]
    %v48 = vpack.c.bf16 %v45, %v44
    %v49 = vpack.c.bf16 %v47, %v46
    %v50 = vld [vmem:[%s4] sm:$0xff]
    %v51 = vld [vmem:[%s4 + $0x8] sm:$0xff]
    %v52 = vld [vmem:[%s4 + $0x10] sm:$0xff]
    %v53 = vld [vmem:[%s4 + $0x18] sm:$0xff]
    %v54 = vld [vmem:[%s5] sm:$0xff]
    %v55 = vld [vmem:[%s5 + $0x8] sm:$0xff]
    %v56 = vld [vmem:[%s5 + $0x10] sm:$0xff]
    %v57 = vld [vmem:[%s5 + $0x18] sm:$0xff]
    %v58 = vpack.c.bf16 %v55, %v54
    %v59 = vpack.c.bf16 %v57, %v56
    %v60 = vld [vmem:[%s6] sm:$0xff]
    %v61 = vld [vmem:[%s6 + $0x8] sm:$0xff]
    %v62 = vld [vmem:[%s6 + $0x10] sm:$0xff]
    %v63 = vld [vmem:[%s6 + $0x18] sm:$0xff]
    %v64 = vld [vmem:[%s7] sm:$0xff]
    %v65 = vld [vmem:[%s7 + $0x8] sm:$0xff]
    %v66 = vld [vmem:[%s7 + $0x10] sm:$0xff]
    %v67 = vld [vmem:[%s7 + $0x18] sm:$0xff]
    %v68 = vld [vmem:[#allocation2] sm:$0x1]
    %v69 = vld [vmem:[%s0] sm:$0x3]
    %71 = vset.pattern.permute.xlu0 0
    %72 = vperm.xlu0 %71, %v36
    %v73 = vpop.permute.xlu0 %72
    %76 = vset.pattern.permute.xlu0 0
    %77 = vperm.xlu0 %76, %v37
    %v78 = vpop.permute.xlu0 %77
    %81 = vset.pattern.permute.xlu0 0
    %82 = vperm.xlu0 %81, %v38
    %v83 = vpop.permute.xlu0 %82
    %86 = vset.pattern.permute.xlu0 0
    %87 = vperm.xlu0 %86, %v39
    %v88 = vpop.permute.xlu0 %87
    %v90 = vperm.slane %v69, 0
    %v91 = vmul.f32 %v73, %v90
    %v92 = vmul.f32 %v78, %v90
    %v93 = vmul.f32 %v83, %v90
    %v94 = vmul.f32 %v88, %v90
    %96 = vset.pattern.permute.xlu0 0
    %97 = vperm.xlu0 %96, %v40
    %v98 = vpop.permute.xlu0 %97
    %101 = vset.pattern.permute.xlu0 0
    %102 = vperm.xlu0 %101, %v41
    %v103 = vpop.permute.xlu0 %102
    %106 = vset.pattern.permute.xlu0 0
    %107 = vperm.xlu0 %106, %v42
    %v108 = vpop.permute.xlu0 %107
    %111 = vset.pattern.permute.xlu0 0
    %112 = vperm.xlu0 %111, %v43
    %v113 = vpop.permute.xlu0 %112
    %v115 = vadd.f32 %v98, %v91
    %v116 = vadd.f32 %v103, %v92
    %v117 = vadd.f32 %v108, %v93
    %v118 = vadd.f32 %v113, %v94
    %119 = vset.pattern.permute.xlu0 1
    %120 = vperm.xlu0 %119, %v36
    %v121 = vpop.permute.xlu0 %120
    %123 = vset.pattern.permute.xlu0 1
    %124 = vperm.xlu0 %123, %v37
    %v125 = vpop.permute.xlu0 %124
    %127 = vset.pattern.permute.xlu0 1
    %128 = vperm.xlu0 %127, %v38
    %v129 = vpop.permute.xlu0 %128
    %131 = vset.pattern.permute.xlu0 1
    %132 = vperm.xlu0 %131, %v39
    %v133 = vpop.permute.xlu0 %132
    %v135 = vperm.slane %v69, 1
    %v136 = vmul.f32 %v121, %v135
    %v137 = vmul.f32 %v125, %v135
    %v138 = vmul.f32 %v129, %v135
    %v139 = vmul.f32 %v133, %v135
    %v140 = vadd.f32 %v115, %v136
    %v141 = vadd.f32 %v116, %v137
    %v142 = vadd.f32 %v117, %v138
    %v143 = vadd.f32 %v118, %v139
    %v144 = vmax.f32 %v140, 0.0
    %v145 = vmax.f32 %v141, 0.0
    %v146 = vmax.f32 %v142, 0.0
    %v147 = vmax.f32 %v143, 0.0
    %v148 = vpack.c.bf16 %v145, %v144
    %v149 = vpack.c.bf16 %v147, %v146
    %151 = vset.pattern.permute.xlu0 0
    %152 = vperm.xlu0 %151, %v50
    %v153 = vpop.permute.xlu0 %152
    %156 = vset.pattern.permute.xlu0 0
    %157 = vperm.xlu0 %156, %v51
    %v158 = vpop.permute.xlu0 %157
    %161 = vset.pattern.permute.xlu0 0
    %162 = vperm.xlu0 %161, %v52
    %v163 = vpop.permute.xlu0 %162
    %166 = vset.pattern.permute.xlu0 0
    %167 = vperm.xlu0 %166, %v53
    %v168 = vpop.permute.xlu0 %167
    %vm170 = vcmask 261120
    %v172 = vsel %vm170, %v48, 0
    %v175 = vsel %vm170, %v49, 0
    %177 = vmatpush.bf16.msra.mxu0 0
    %178 = vmatpush.bf16.msra.mxu0 0
    %179 = vmatpush.bf16.msra.mxu0 0
    %180 = vmatpush.bf16.msra.mxu0 0
    %181 = vmatpush.bf16.msra.mxu0 0
    %182 = vmatpush.bf16.msra.mxu0 0
    %183 = vmatpush.bf16.msra.mxu0 %v149
    %184 = vmatpush.bf16.msra.mxu0 %v148
    %185 = vmatmul.bf16.gmra.mxu0 %v172
    %v186 = vpop.f32.mrf.mxu0
    %v187 = vadd.f32 %v153, %v186
    %v188 = vpop.f32.mrf.mxu0
    %v189 = vadd.f32 %v158, %v188
    %190 = vmatmul.bf16.gmra.mxu0 %v175
    %v191 = vpop.f32.mrf.mxu0
    %v192 = vadd.f32 %v163, %v191
    %v193 = vpop.f32.mrf.mxu0
    %v194 = vadd.f32 %v168, %v193
    %195 = vdwg.mxu0
    %v196 = vmax.f32 %v187, 0.0
    %v197 = vmax.f32 %v189, 0.0
    %v198 = vmax.f32 %v192, 0.0
    %v199 = vmax.f32 %v194, 0.0
    %v200 = vpack.c.bf16 %v197, %v196
    %v201 = vpack.c.bf16 %v199, %v198
    %203 = vset.pattern.permute.xlu0 0
    %204 = vperm.xlu0 %203, %v60
    %v205 = vpop.permute.xlu0 %204
    %208 = vset.pattern.permute.xlu0 0
    %209 = vperm.xlu0 %208, %v61
    %v210 = vpop.permute.xlu0 %209
    %213 = vset.pattern.permute.xlu0 0
    %214 = vperm.xlu0 %213, %v62
    %v215 = vpop.permute.xlu0 %214
    %218 = vset.pattern.permute.xlu0 0
    %219 = vperm.xlu0 %218, %v63
    %v220 = vpop.permute.xlu0 %219
    %v223 = vsel %vm170, %v58, 0
    %v226 = vsel %vm170, %v59, 0
    %228 = vmatpush.bf16.msra.mxu0 0
    %229 = vmatpush.bf16.msra.mxu0 0
    %230 = vmatpush.bf16.msra.mxu0 0
    %231 = vmatpush.bf16.msra.mxu0 0
    %232 = vmatpush.bf16.msra.mxu0 0
    %233 = vmatpush.bf16.msra.mxu0 0
    %234 = vmatpush.bf16.msra.mxu0 %v201
    %235 = vmatpush.bf16.msra.mxu0 %v200
    %236 = vmatmul.bf16.gmra.mxu0 %v223
    %v237 = vpop.f32.mrf.mxu0
    %v238 = vadd.f32 %v205, %v237
    %v239 = vpop.f32.mrf.mxu0
    %v240 = vadd.f32 %v210, %v239
    %241 = vmatmul.bf16.gmra.mxu0 %v226
    %v242 = vpop.f32.mrf.mxu0
    %v243 = vadd.f32 %v215, %v242
    %v244 = vpop.f32.mrf.mxu0
    %v245 = vadd.f32 %v220, %v244
    %246 = vdwg.mxu0
    %v247 = vmax.f32 %v238, 0.0
    %v248 = vmax.f32 %v240, 0.0
    %v249 = vmax.f32 %v243, 0.0
    %v250 = vmax.f32 %v245, 0.0
    %252 = vset.pattern.permute.xlu0 0
    %253 = vperm.xlu0 %252, %v64
    %v254 = vpop.permute.xlu0 %253
    %257 = vset.pattern.permute.xlu0 0
    %258 = vperm.xlu0 %257, %v65
    %v259 = vpop.permute.xlu0 %258
    %262 = vset.pattern.permute.xlu0 0
    %263 = vperm.xlu0 %262, %v66
    %v264 = vpop.permute.xlu0 %263
    %267 = vset.pattern.permute.xlu0 0
    %268 = vperm.xlu0 %267, %v67
    %v269 = vpop.permute.xlu0 %268
    %v271 = vmul.f32 %v254, %v247
    %v272 = vmul.f32 %v259, %v248
    %v273 = vmul.f32 %v264, %v249
    %v274 = vmul.f32 %v269, %v250
    %v275 = vadd.f32 %v271, %v272
    %v276 = vadd.f32 %v275, %v273
    %v277 = vadd.f32 %v276, %v274
    %v278 = vrot.slane %v277, 4
    %v279 = vadd.f32 %v277, %v278
    %v280 = vrot.slane %v279, 2
    %v281 = vadd.f32 %v279, %v280
    %v282 = vrot.slane %v281, 1
    %v283 = vadd.f32 %v281, %v282
    %285 = vset.pattern.permute.xlu0 0
    %286 = vperm.xlu0 %285, %v68
    %v287 = vpop.permute.xlu0 %286
    %v289 = vperm.slane %v287, 0
    %v290 = vadd.f32 %v283, %v289
    %291 = vst [vmem:[#allocation3] sm:$0x1] %v290
    // Predicated region
    $region38: #{tpu_custom_call.1} parent=1 // pred_check
      _
    $region39: #{tpu_custom_call.1} parent=1 // pred_check_branch
      %293 = sbr.rel (0) target = $region41
    $region40: #{tpu_custom_call.1} parent=1 // pred_region
      %295 = vsyncadd [#allocation4], 0
      %s297 = sshll.u32 [#allocation3], 4
      %s298 = int_to_ptr.vmem [resolvable:$true] %s297
      %s299 = sshll.u32 %s9, 4
      %s300 = int_to_ptr.hbm [resolvable:$true] %s299
      %302 = dma.vmem_to_hbm [thread:$0]  %s298, 16, %s300, [#allocation4]
    $region41: #{tpu_custom_call.1} parent=1 // pred_fallthru
      _
    // Predicated region
    $region42: #{tpu_custom_call.1} parent=1 // pred_check
      _
    $region43: #{tpu_custom_call.1} parent=1 // pred_check_branch
      %304 = sbr.rel (0) target = $region45
    $region44: #{tpu_custom_call.1} parent=1 // pred_region
      %306 = dma.done [#allocation4], 16
    $region45: #{tpu_custom_call.1} parent=1 // pred_fallthru
      _
    %307 = vsyncpa [#allocation4], 1

</llo_original>
